<compile_context>
chip_gen: v5e
topology: v5e:2x2
jax: 0.10.0
libtpu: 0.0.40
codegen_flags: <defaults>
</compile_context>

<pallas_src>
import functools

import jax
import jax.numpy as jnp
from jax.experimental import pallas as pl
from jax.experimental.pallas import tpu as pltpu

LANE = 128  # TPU lane width


def block1_kernel(x_ref, wT_ref, b_ref, gamma_ref, beta_ref, o_ref, *, eps):
    # Linear: h = x @ W^T + b  (bf16 operands, f32 accumulation on the MXU).
    h = jnp.dot(x_ref[...], wT_ref[...],
                preferred_element_type=jnp.float32) + b_ref[...]

    # BatchNorm1d (training mode): per-feature batch mean / biased variance.
    # The full batch lives in this block (only the feature axis is tiled), so
    # axis-0 stats over the block are the true batch stats.
    n = h.shape[0]
    inv_n = 1.0 / n
    mean = jnp.sum(h, axis=0, keepdims=True) * inv_n
    centered = h - mean
    var = jnp.sum(centered * centered, axis=0, keepdims=True) * inv_n
    scale = gamma_ref[...] * jax.lax.rsqrt(var + eps)   # fold gamma * inv_std
    y = centered * scale + beta_ref[...]

    # Swish: y * sigmoid(y)   (sigmoid rides the EUP slot)
    o_ref[...] = (y * jax.nn.sigmoid(y)).astype(o_ref.dtype)


def _round_up(n, m):
    return ((n + m - 1) // m) * m


def prepare_block1_params(w, b, gamma, beta):
    """One-time prep (do this outside any hot loop): transpose W, zero-pad the
    feature dims to a multiple of 128 (lane-dense), cast the matmul operand to
    bf16, and lay bias/gamma/beta out as (1, D_pad) f32 rows."""
    d_out, d_in = w.shape
    d_in_p = _round_up(d_in, LANE)
    d_out_p = _round_up(d_out, LANE)

    wT = jnp.zeros((d_in_p, d_out_p), jnp.float32)
    wT = wT.at[:d_in, :d_out].set(jnp.transpose(w).astype(jnp.float32))
    wT = wT.astype(jnp.bfloat16)

    def pad_row(v):
        row = jnp.zeros((1, d_out_p), jnp.float32)
        return row.at[0, :d_out].set(v.astype(jnp.float32))

    return wT, pad_row(b), pad_row(gamma), pad_row(beta), d_out


def block1_forward(x, wT_pad, b_pad, gamma_pad, beta_pad, d_out,
                   eps=1e-5, feature_tile=LANE):
    """x: (N, D_in) float32. Prepared params from prepare_block1_params."""
    N, d_in = x.shape
    d_in_p, d_out_p = wT_pad.shape

    # Pad x's feature axis (zero columns hit zero rows of wT_pad -> no effect)
    # and cast the matmul operand to bf16.
    x_pad = jnp.zeros((N, d_in_p), jnp.bfloat16)
    x_pad = x_pad.at[:, :d_in].set(x.astype(jnp.bfloat16))

    tD = min(feature_tile, d_out_p)
    grid = (d_out_p // tD,)

    out_pad = pl.pallas_call(
        functools.partial(block1_kernel, eps=float(eps)),
        out_shape=jax.ShapeDtypeStruct((N, d_out_p), jnp.float32),
        grid=grid,
        in_specs=[
            pl.BlockSpec((N, d_in_p), lambda j: (0, 0)),   # x resident across tiles
            pl.BlockSpec((d_in_p, tD), lambda j: (0, j)),  # weight tile
            pl.BlockSpec((1, tD), lambda j: (0, j)),       # bias tile
            pl.BlockSpec((1, tD), lambda j: (0, j)),       # gamma tile
            pl.BlockSpec((1, tD), lambda j: (0, j)),       # beta tile
        ],
        out_specs=pl.BlockSpec((N, tD), lambda j: (0, j)), # lane-dense output
        compiler_params=pltpu.CompilerParams(
            dimension_semantics=("parallel",),             # v7x: 2 TCs split tiles
            vmem_limit_bytes=48 * 1024 * 1024,             # explicit v7x-safe budget
        ),
    )(x_pad, wT_pad, b_pad, gamma_pad, beta_pad)

    return out_pad[:, :d_out]


if __name__ == "__main__":
    N, D = 8, 32  # batch, in_shape

    key = jax.random.PRNGKey(0)
    kx, kw, kb = jax.random.split(key, 3)

    # Deterministic parameter init (PyTorch Linear-style uniform bound 1/sqrt(D)).
    bound = 1.0 / (D ** 0.5)
    x = jax.random.normal(kx, (N, D), dtype=jnp.float32)
    w = jax.random.uniform(kw, (D, D), dtype=jnp.float32, minval=-bound, maxval=bound)
    b = jax.random.uniform(kb, (D,), dtype=jnp.float32, minval=-bound, maxval=bound)
    gamma = jnp.ones((D,), dtype=jnp.float32)   # BatchNorm1d affine weight
    beta = jnp.zeros((D,), dtype=jnp.float32)   # BatchNorm1d affine bias

    wT_p, b_p, g_p, be_p, d_out = prepare_block1_params(w, b, gamma, beta)
    out = block1_forward(x, wT_p, b_p, g_p, be_p, d_out)
    jax.block_until_ready(out)

    def bn_swish(h):
        mean = h.mean(axis=0, keepdims=True)
        var = ((h - mean) ** 2).mean(axis=0, keepdims=True)
        y = (h - mean) / jnp.sqrt(var + 1e-5) * gamma + beta
        return y * jax.nn.sigmoid(y)

    # Reference 1: identical math with matching bf16 matmul operands (tight).
    h_bf = jnp.dot(x.astype(jnp.bfloat16), w.T.astype(jnp.bfloat16),
                   preferred_element_type=jnp.float32) + b
    ref_bf = bn_swish(h_bf)
    assert jnp.allclose(out, ref_bf, atol=1e-4, rtol=1e-4), "mismatch vs bf16-operand reference"

    # Reference 2: pure f32 math (module semantics; looser tol covers bf16
    # operand rounding in the Linear, accumulation is still f32).
    ref_f32 = bn_swish(x @ w.T + b)
    assert jnp.allclose(out, ref_f32, atol=3e-2, rtol=3e-2), "mismatch vs f32 reference"

    print("KERNEL_OK")
</pallas_src>

<mosaic_0001>
module attributes {stable_mosaic.version = 11 : i64} {
  func.func @block1_kernel(%arg0: i32, %arg1: memref<8x128xbf16, #tpu.memory_space<vmem>>, %arg2: memref<128x128xbf16, #tpu.memory_space<vmem>>, %arg3: memref<1x128xf32, #tpu.memory_space<vmem>>, %arg4: memref<1x128xf32, #tpu.memory_space<vmem>>, %arg5: memref<1x128xf32, #tpu.memory_space<vmem>>, %arg6: memref<8x128xf32, #tpu.memory_space<vmem>>) attributes {dimension_semantics = [#tpu.dimension_semantics<parallel>], iteration_bounds = array<i64: 1>, scalar_prefetch = 0 : i64, scratch_operands = 0 : i64, tpu.core_type = #tpu.core_type<tc>, window_params = [{pipeline_mode = #tpu.pipeline_mode<synchronous>, transform_indices = @transform_0, window_bounds = array<i64: 8, 128>}, {transform_indices = @transform_1, window_bounds = array<i64: 128, 128>}, {transform_indices = @transform_2, window_bounds = array<i64: 1, 128>}, {transform_indices = @transform_3, window_bounds = array<i64: 1, 128>}, {transform_indices = @transform_4, window_bounds = array<i64: 1, 128>}, {transform_indices = @transform_5, window_bounds = array<i64: 8, 128>}]} {
    %c0 = arith.constant 0 : index
    %c0_0 = arith.constant 0 : index
    %0 = vector.load %arg1[%c0, %c0_0] : memref<8x128xbf16, #tpu.memory_space<vmem>>, vector<8x128xbf16>
    %c0_1 = arith.constant 0 : index
    %c0_2 = arith.constant 0 : index
    %1 = vector.load %arg2[%c0_1, %c0_2] : memref<128x128xbf16, #tpu.memory_space<vmem>>, vector<128x128xbf16>
    %cst = arith.constant dense<0.000000e+00> : vector<8x128xf32>
    %2 = tpu.matmul %0, %1, %cst {dimension_numbers = #tpu.dot_dimension_numbers<[1], [0], [0], [1], [0, 0, 1, 1], [], []>} : vector<8x128xbf16>, vector<128x128xbf16>, vector<8x128xf32> -> vector<8x128xf32>
    %c0_3 = arith.constant 0 : index
    %c0_4 = arith.constant 0 : index
    %3 = vector.load %arg3[%c0_3, %c0_4] : memref<1x128xf32, #tpu.memory_space<vmem>>, vector<1x128xf32>
    %4 = vector.broadcast %3 : vector<1x128xf32> to vector<8x128xf32>
    %5 = arith.addf %2, %4 : vector<8x128xf32>
    %cst_5 = arith.constant dense<0.000000e+00> : vector<128xf32>
    %6 = vector.multi_reduction <add>, %5, %cst_5 [0] : vector<8x128xf32> to vector<128xf32>
    %7 = vector.shape_cast %6 : vector<128xf32> to vector<1x128xf32>
    %cst_6 = arith.constant 1.250000e-01 : f32
    %8 = vector.broadcast %cst_6 : f32 to vector<1x128xf32>
    %9 = arith.mulf %7, %8 : vector<1x128xf32>
    %10 = vector.broadcast %9 : vector<1x128xf32> to vector<8x128xf32>
    %11 = arith.subf %5, %10 : vector<8x128xf32>
    %12 = arith.mulf %11, %11 : vector<8x128xf32>
    %cst_7 = arith.constant dense<0.000000e+00> : vector<128xf32>
    %13 = vector.multi_reduction <add>, %12, %cst_7 [0] : vector<8x128xf32> to vector<128xf32>
    %14 = vector.shape_cast %13 : vector<128xf32> to vector<1x128xf32>
    %cst_8 = arith.constant 1.250000e-01 : f32
    %15 = vector.broadcast %cst_8 : f32 to vector<1x128xf32>
    %16 = arith.mulf %14, %15 : vector<1x128xf32>
    %c0_9 = arith.constant 0 : index
    %c0_10 = arith.constant 0 : index
    %17 = vector.load %arg4[%c0_9, %c0_10] : memref<1x128xf32, #tpu.memory_space<vmem>>, vector<1x128xf32>
    %cst_11 = arith.constant 9.99999974E-6 : f32
    %18 = vector.broadcast %cst_11 : f32 to vector<1x128xf32>
    %19 = arith.addf %16, %18 : vector<1x128xf32>
    %20 = math.rsqrt %19 : vector<1x128xf32>
    %21 = arith.mulf %17, %20 : vector<1x128xf32>
    %22 = vector.broadcast %21 : vector<1x128xf32> to vector<8x128xf32>
    %23 = arith.mulf %11, %22 : vector<8x128xf32>
    %c0_12 = arith.constant 0 : index
    %c0_13 = arith.constant 0 : index
    %24 = vector.load %arg5[%c0_12, %c0_13] : memref<1x128xf32, #tpu.memory_space<vmem>>, vector<1x128xf32>
    %25 = vector.broadcast %24 : vector<1x128xf32> to vector<8x128xf32>
    %26 = arith.addf %23, %25 : vector<8x128xf32>
    %27 = arith.negf %26 : vector<8x128xf32>
    %28 = math.exp %27 : vector<8x128xf32>
    %cst_14 = arith.constant 1.000000e+00 : f32
    %29 = vector.broadcast %cst_14 : f32 to vector<8x128xf32>
    %30 = arith.addf %29, %28 : vector<8x128xf32>
    %31 = arith.divf %29, %30 : vector<8x128xf32>
    %32 = arith.mulf %26, %31 : vector<8x128xf32>
    %c0_15 = arith.constant 0 : index
    %c0_16 = arith.constant 0 : index
    %33 = vector.load %arg6[%c0_15, %c0_16] : memref<8x128xf32, #tpu.memory_space<vmem>>, vector<8x128xf32>
    tpu.vector_store %arg6[%c0_15, %c0_16], %32 {strides = array<i32>} : memref<8x128xf32, #tpu.memory_space<vmem>>, vector<8x128xf32>,
    return
  }
  func.func @transform_0(%arg0: i32) -> (i32, i32) {
    %c0_i32 = arith.constant 0 : i32
    %c0_i32_0 = arith.constant 0 : i32
    %c0_i32_1 = arith.constant 0 : i32
    return %c0_i32, %c0_i32_0 : i32, i32
  }
  func.func @transform_1(%arg0: i32) -> (i32, i32) {
    %c0_i32 = arith.constant 0 : i32
    %c0_i32_0 = arith.constant 0 : i32
    return %c0_i32, %arg0 : i32, i32
  }
  func.func @transform_2(%arg0: i32) -> (i32, i32) {
    %c0_i32 = arith.constant 0 : i32
    %c0_i32_0 = arith.constant 0 : i32
    return %c0_i32, %arg0 : i32, i32
  }
  func.func @transform_3(%arg0: i32) -> (i32, i32) {
    %c0_i32 = arith.constant 0 : i32
    %c0_i32_0 = arith.constant 0 : i32
    return %c0_i32, %arg0 : i32, i32
  }
  func.func @transform_4(%arg0: i32) -> (i32, i32) {
    %c0_i32 = arith.constant 0 : i32
    %c0_i32_0 = arith.constant 0 : i32
    return %c0_i32, %arg0 : i32, i32
  }
  func.func @transform_5(%arg0: i32) -> (i32, i32) {
    %c0_i32 = arith.constant 0 : i32
    %c0_i32_0 = arith.constant 0 : i32
    return %c0_i32, %arg0 : i32, i32
  }
}

</mosaic_0001>

<llo_original>
// kernel: tpu_custom_call.1
$region0: #{tpu_custom_call.1}
  #allocation0 [shape = 'u32[]', space=smem, size = 0x4, offset = 0x4, fixed_abs, tag = 'smem constant byte address 0x4 - core index']
  #allocation1 [shape = 'u32[72,128]{1,0:T(1,128)}', space=vmem, size = 0x9000, scoped, tag = 'internal scratch']
  %s0 = inlined_call_operand.hbm [shape: bf16[8,128], index: 0, kind: input, shape index: {}]
  %s1 = inlined_call_operand.hbm [shape: bf16[128,128], index: 1, kind: input, shape index: {}]
  %s2 = inlined_call_operand.vmem [shape: f32[1,128], index: 2, kind: input, shape index: {}]
  %s3 = inlined_call_operand.vmem [shape: f32[1,128], index: 3, kind: input, shape index: {}]
  %s4 = inlined_call_operand.vmem [shape: f32[1,128], index: 4, kind: input, shape index: {}]
  %s5 = inlined_call_operand.hbm [shape: f32[8,128], index: 5, kind: output, shape index: {}]
  %s6 = sld [smem:[#allocation0]]
  $region38: #{tpu_custom_call.1} parent=0
    _
  %s8 = ssub.s32 1, %s6
  %s9 = scalar_select 0, %s8, %s6
  $region1: #{tpu_custom_call.1} parent=0
    #allocation2 [shape = 'u8[2048]{0}', space=vmem, size = 0x800, scoped, tag = 'input window, operand 0, single buffered']
    #allocation3 [shape = 's32[1]{0}', space=sflag, size = 0x4, scoped, tag = 'scoped memory for tpu_custom_call.1']
    #allocation4 [shape = 's32[1]{0}', space=sflag, size = 0x4, scoped, tag = 'scoped memory for tpu_custom_call.1']
    #allocation5 [shape = 'u8[32768]{0}', space=vmem, size = 0x8000, scoped, tag = 'input window, operand 1, single buffered']
    #allocation6 [shape = 's32[1]{0}', space=sflag, size = 0x4, scoped, tag = 'scoped memory for tpu_custom_call.1']
    #allocation7 [shape = 'u8[4096]{0}', space=vmem, size = 0x1000, scoped, tag = 'output window, operand 0, single buffered']
    %10 = vsyncpa [#allocation3], 0
    %11 = vsyncpa [#allocation6], 0
    %12 = vsyncpa [#allocation4], 0
    // Predicated region
    $region2: #{tpu_custom_call.1} parent=1 // pred_check
      _
    $region3: #{tpu_custom_call.1} parent=1 // pred_check_branch
      %14 = sbr.rel (0) target = $region5
    $region4: #{tpu_custom_call.1} parent=1 // pred_region
      %16 = vsyncadd [#allocation3], 0
      %s18 = sshll.u32 %s0, 4
      %s19 = int_to_ptr.hbm [resolvable:$true] %s18
      %s20 = sshll.u32 [#allocation2], 4
      %s21 = int_to_ptr.vmem [resolvable:$true] %s20
      %23 = dma.hbm_to_vmem [thread:$0]  %s19, 64, %s21, [#allocation3]
    $region5: #{tpu_custom_call.1} parent=1 // pred_fallthru
      _
    // Predicated region
    $region6: #{tpu_custom_call.1} parent=1 // pred_check
      _
    $region7: #{tpu_custom_call.1} parent=1 // pred_check_branch
      %25 = sbr.rel (0) target = $region9
    $region8: #{tpu_custom_call.1} parent=1 // pred_region
      %27 = vsyncadd [#allocation6], 0
      %s28 = sshll.u32 %s1, 4
      %s29 = int_to_ptr.hbm [resolvable:$true] %s28
      %s30 = sshll.u32 [#allocation5], 4
      %s31 = int_to_ptr.vmem [resolvable:$true] %s30
      %36 = dma.hbm_to_vmem [thread:$0]  %s29, 1024, %s31, [#allocation6], 64, 64, 4
    $region9: #{tpu_custom_call.1} parent=1 // pred_fallthru
      _
    // Predicated region
    $region10: #{tpu_custom_call.1} parent=1 // pred_check
      _
    $region11: #{tpu_custom_call.1} parent=1 // pred_check_branch
      %38 = sbr.rel (0) target = $region13
    $region12: #{tpu_custom_call.1} parent=1 // pred_region
      _
    $region13: #{tpu_custom_call.1} parent=1 // pred_fallthru
      _
    // Predicated region
    $region14: #{tpu_custom_call.1} parent=1 // pred_check
      _
    $region15: #{tpu_custom_call.1} parent=1 // pred_check_branch
      %40 = sbr.rel (0) target = $region17
    $region16: #{tpu_custom_call.1} parent=1 // pred_region
      _
    $region17: #{tpu_custom_call.1} parent=1 // pred_fallthru
      _
    // Predicated region
    $region18: #{tpu_custom_call.1} parent=1 // pred_check
      _
    $region19: #{tpu_custom_call.1} parent=1 // pred_check_branch
      %42 = sbr.rel (0) target = $region21
    $region20: #{tpu_custom_call.1} parent=1 // pred_region
      _
    $region21: #{tpu_custom_call.1} parent=1 // pred_fallthru
      _
    // Predicated region
    $region22: #{tpu_custom_call.1} parent=1 // pred_check
      _
    $region23: #{tpu_custom_call.1} parent=1 // pred_check_branch
      %44 = sbr.rel (0) target = $region25
    $region24: #{tpu_custom_call.1} parent=1 // pred_region
      %46 = dma.done [#allocation3], 64
    $region25: #{tpu_custom_call.1} parent=1 // pred_fallthru
      _
    // Predicated region
    $region26: #{tpu_custom_call.1} parent=1 // pred_check
      _
    $region27: #{tpu_custom_call.1} parent=1 // pred_check_branch
      %48 = sbr.rel (0) target = $region29
    $region28: #{tpu_custom_call.1} parent=1 // pred_region
      %50 = dma.done [#allocation6], 1024
    $region29: #{tpu_custom_call.1} parent=1 // pred_fallthru
      _
    %v51 = vld [vmem:[#allocation2] sm:$0xf]
    %v52 = vld [vmem:[#allocation5] sm:$0xf]
    %v53 = vld [vmem:[#allocation5 + $0x4] sm:$0xf]
    %v54 = vld [vmem:[#allocation5 + $0x8] sm:$0xf]
    %v55 = vld [vmem:[#allocation5 + $0xc] sm:$0xf]
    %v56 = vld [vmem:[#allocation5 + $0x10] sm:$0xf]
    %v57 = vld [vmem:[#allocation5 + $0x14] sm:$0xf]
    %v58 = vld [vmem:[#allocation5 + $0x18] sm:$0xf]
    %v59 = vld [vmem:[#allocation5 + $0x1c] sm:$0xf]
    %v60 = vld [vmem:[#allocation5 + $0x20] sm:$0xf]
    %v61 = vld [vmem:[#allocation5 + $0x24] sm:$0xf]
    %v62 = vld [vmem:[#allocation5 + $0x28] sm:$0xf]
    %v63 = vld [vmem:[#allocation5 + $0x2c] sm:$0xf]
    %v64 = vld [vmem:[#allocation5 + $0x30] sm:$0xf]
    %v65 = vld [vmem:[#allocation5 + $0x34] sm:$0xf]
    %v66 = vld [vmem:[#allocation5 + $0x38] sm:$0xf]
    %v67 = vld [vmem:[#allocation5 + $0x3c] sm:$0xf]
    %v68 = vld [vmem:[%s2] sm:$0x1]
    %v70 = vperm.slane %v68, 0
    %v88 = vunpack.c.l.b16 %v52
    %v89 = vunpack.c.l.b16 %v53
    %v90 = vunpack.c.l.b16 %v54
    %v91 = vunpack.c.l.b16 %v55
    %v92 = vunpack.c.l.b16 %v56
    %v93 = vunpack.c.l.b16 %v57
    %v94 = vunpack.c.l.b16 %v58
    %v95 = vunpack.c.l.b16 %v59
    %v96 = vunpack.c.l.b16 %v60
    %v97 = vunpack.c.l.b16 %v61
    %v98 = vunpack.c.l.b16 %v62
    %v99 = vunpack.c.l.b16 %v63
    %v100 = vunpack.c.l.b16 %v64
    %v101 = vunpack.c.l.b16 %v65
    %v102 = vunpack.c.l.b16 %v66
    %v103 = vunpack.c.l.b16 %v67
    %v104 = vpack.c.b16 %v89, %v88
    %v105 = vpack.c.b16 %v91, %v90
    %v106 = vpack.c.b16 %v93, %v92
    %v107 = vpack.c.b16 %v95, %v94
    %v108 = vpack.c.b16 %v97, %v96
    %v109 = vpack.c.b16 %v99, %v98
    %v110 = vpack.c.b16 %v101, %v100
    %v111 = vpack.c.b16 %v103, %v102
    %120 = vmatpush.bf16.msra.mxu0 %v111
    %121 = vmatpush.bf16.msra.mxu0 %v110
    %122 = vmatpush.bf16.msra.mxu0 %v109
    %123 = vmatpush.bf16.msra.mxu0 %v108
    %124 = vmatpush.bf16.msra.mxu0 %v107
    %125 = vmatpush.bf16.msra.mxu0 %v106
    %126 = vmatpush.bf16.msra.mxu0 %v105
    %127 = vmatpush.bf16.msra.mxu0 %v104
    %128 = vmatmul.bf16.gmra.mxu0 %v51
    %v129 = vpop.f32.mrf.mxu0
    %v130 = vadd.f32 %v70, %v129
    %v131 = vpop.f32.mrf.mxu0
    %132 = vdwg.mxu0
    %v133 = vrot.slane %v130, 4
    %v134 = vadd.f32 %v130, %v133
    %v135 = vrot.slane %v134, 2
    %v136 = vadd.f32 %v134, %v135
    %v137 = vrot.slane %v136, 1
    %v138 = vadd.f32 %v136, %v137
    %v139 = vmul.f32 %v138, 0.125
    %v140 = vsub.f32 %v130, %v139
    %v141 = vmul.f32 %v140, %v140
    %v142 = vrot.slane %v141, 4
    %v143 = vadd.f32 %v141, %v142
    %v144 = vrot.slane %v143, 2
    %v145 = vadd.f32 %v143, %v144
    %v146 = vrot.slane %v145, 1
    %v147 = vadd.f32 %v145, %v146
    %v148 = vmul.f32 %v147, 0.125
    %v149 = vld [vmem:[%s3] sm:$0x1]
    %v150 = vadd.f32 %v148, 1e-05
    %v151 = vrsqrt.pop %v150
    %v152 = vmul.f32 %v151, %v150
    %v153 = vmul.f32 %v152, %v151
    %v154 = vmul.f32 0.5, %v153
    %v155 = vsub.f32 1.5, %v154
    %v156 = vmul.f32 %v151, %v155
    %vm157 = vweird.f32 %v150
    %vm158 = vweird.f32 %v151
    %vm159 = vmor %vm157, %vm158
    %v160 = vsel %vm159, %v151, %v156
    %v161 = vmul.f32 %v149, %v160
    %v163 = vperm.slane %v161, 0
    %v165 = vmul.f32 %v140, %v163
    %v166 = vld [vmem:[%s4] sm:$0x1]
    %v168 = vperm.slane %v166, 0
    %v170 = vadd.f32 %v165, %v168
    %v171 = vxor.u32 %v170, 2147483648
    %v172 = vmul.f32 %v171, 1.442695
    %v173 = vpow.pop %v172
    %v174 = vadd.f32 %v173, 1.0
    %v175 = vrcp.pop %v174
    %v176 = vmul.f32 %v174, %v175
    %v177 = vsub.f32 1.0, %v176
    %v178 = vmul.f32 %v175, %v177
    %v179 = vadd.f32 %v175, %v178
    %vm180 = vweird.f32 %v174
    %vm181 = vweird.f32 %v175
    %vm182 = vmor %vm180, %vm181
    %v183 = vsel %vm182, %v175, %v179
    %v184 = vand.u32 2147483647, %v174
    %vm185 = vcmp.eq.f32.partialorder %v184, 8.507059e+37
    %v186 = vand.u32 %v174, 2147483648
    %v187 = vor.u32 1.1754944e-38, %v186
    %v188 = vsel %vm185, %v187, %v183
    %v189 = vmul.f32 1.0, %v188
    %v190 = vmul.f32 %v170, %v189
    %191 = vst [vmem:[#allocation7] sm:$0xff] %v190
    // Predicated region
    $region30: #{tpu_custom_call.1} parent=1 // pred_check
      _
    $region31: #{tpu_custom_call.1} parent=1 // pred_check_branch
      %193 = sbr.rel (0) target = $region33
    $region32: #{tpu_custom_call.1} parent=1 // pred_region
      %195 = vsyncadd [#allocation4], 0
      %s197 = sshll.u32 [#allocation7], 4
      %s198 = int_to_ptr.vmem [resolvable:$true] %s197
      %s199 = sshll.u32 %s5, 4
      %s200 = int_to_ptr.hbm [resolvable:$true] %s199
      %202 = dma.vmem_to_hbm [thread:$0]  %s198, 128, %s200, [#allocation4]
    $region33: #{tpu_custom_call.1} parent=1 // pred_fallthru
      _
    // Predicated region
    $region34: #{tpu_custom_call.1} parent=1 // pred_check
      _
    $region35: #{tpu_custom_call.1} parent=1 // pred_check_branch
      %204 = sbr.rel (0) target = $region37
    $region36: #{tpu_custom_call.1} parent=1 // pred_region
      %206 = dma.done [#allocation4], 128
    $region37: #{tpu_custom_call.1} parent=1 // pred_fallthru
      _
    %207 = vsyncpa [#allocation3], 1
    %208 = vsyncpa [#allocation6], 1
    %209 = vsyncpa [#allocation4], 1

</llo_original>
